<compile_context>
chip_gen: v7x
topology: tpu7x:2x2x1
jax: 0.10.0
libtpu: 0.0.40
codegen_flags: <defaults>
</compile_context>

<pallas_src>
import functools

import jax
import jax.numpy as jnp
from jax import lax
from jax.experimental import pallas as pl
from jax.experimental.pallas import tpu as pltpu


def _round_up(v, m):
    return ((v + m - 1) // m) * m


def _cdiv(a, b):
    return -(-a // b)


# ---------------------------------------------------------------------------
# Kernels
# ---------------------------------------------------------------------------

def _pow_clamped(x_ref, p_ref, eps, static_p):
    """clamp(min=eps) then x**p in f32.  Static integer p -> VPU multiplies
    (no per-element EUP transcendentals); runtime p -> exp(p*log(x))."""
    x = jnp.maximum(x_ref[...].astype(jnp.float32), eps)
    if static_p is not None:
        return lax.integer_pow(x, static_p)
    # TODO(synk): if a learnable non-integer p is ever EUP-bound on v7x, a bf16
    # exp/log here trades ~1e-3 relative error for ~2x EUP throughput.
    return jnp.exp(p_ref[0] * jnp.log(x))


def _root(m, p_ref, static_p):
    """m ** (1/p) — per output row only, negligible EUP cost."""
    if static_p is not None:
        if static_p == 1:
            return m
        if static_p == 2:
            return jnp.sqrt(m)
        return jnp.exp(jnp.log(m) * (1.0 / float(static_p)))
    return jnp.exp(jnp.log(m) * (1.0 / p_ref[0]))


def _gem_single_kernel(p_ref, x_ref, o_ref, *, eps, hw, g, static_p):
    """One lane block covers the whole (packed) spatial extent: no accumulator
    scratch, no masking, finalize immediately."""
    xp = _pow_clamped(x_ref, p_ref, eps, static_p)
    if g > 1:
        # Segmented per-super-row reduce on the (otherwise idle) MXU:
        # seg[j, c] = 1 iff lane j belongs to packed channel c (lanes [c*hw,
        # (c+1)*hw)).  Built without integer division: d = j - c*hw in [0, hw).
        L = g * hw
        j = lax.broadcasted_iota(jnp.int32, (L, g), 0)
        c = lax.broadcasted_iota(jnp.int32, (L, g), 1)
        d = j - c * hw
        seg = ((d >= 0) & (d < hw)).astype(jnp.float32)
        s = jnp.dot(xp, seg, preferred_element_type=jnp.float32)   # (rows, g)
    else:
        s = jnp.sum(xp, axis=-1, keepdims=True)                    # (rows, 1)
    m = s * (1.0 / hw)
    o_ref[...] = _root(m, p_ref, static_p).astype(o_ref.dtype)


def _gem_accum_kernel(p_ref, x_ref, o_ref, acc_ref, *, eps, hw, lane_tile,
                      static_p):
    """Huge spatial extent: f32 accumulator in VMEM scratch across the lane
    grid axis; the ragged-lane mask is paid only on the last lane block."""
    k = pl.program_id(1)
    nk = pl.num_programs(1)

    @pl.when(k == 0)
    def _():
        acc_ref[...] = jnp.zeros_like(acc_ref)

    xp = _pow_clamped(x_ref, p_ref, eps, static_p)

    if hw % lane_tile != 0:
        # Mask only on the ragged last block (mask AFTER the pow, so the
        # garbage lanes never feed log()).
        @pl.when(k < nk - 1)
        def _():
            acc_ref[...] += jnp.sum(xp, axis=-1, keepdims=True)

        @pl.when(k == nk - 1)
        def _():
            lane = lax.broadcasted_iota(jnp.int32, xp.shape, 1)
            xm = jnp.where(k * lane_tile + lane < hw, xp, 0.0)
            acc_ref[...] += jnp.sum(xm, axis=-1, keepdims=True)
    else:
        acc_ref[...] += jnp.sum(xp, axis=-1, keepdims=True)

    @pl.when(k == nk - 1)
    def _():
        m = acc_ref[...] * (1.0 / hw)
        o_ref[...] = _root(m, p_ref, static_p).astype(o_ref.dtype)


# ---------------------------------------------------------------------------
# Wrapper: layout + tiling decisions
# ---------------------------------------------------------------------------

def _pick_group(nc, hw, max_lanes=2048):
    """Row packing factor g (g | nc): pack g (batch, channel) rows into one
    lane row when HW is small / misaligned, recovering 128-lane utilization
    (e.g. HW=49 -> g=5/15 gives ~96% lane use instead of 38%)."""
    if hw >= 256 and hw % 128 == 0:
        return 1
    best_g = 1
    best = (hw / _round_up(hw, 128), min(hw, 512))
    g = 2
    while g <= nc and g * hw <= max_lanes:
        if nc % g == 0:
            L = g * hw
            score = (L / _round_up(L, 128), min(L, 512))
            if score > best:
                best, best_g = score, g
        g += 1
    return best_g


def _vmem_config():
    """(scoped VMEM limit, per-x-block byte target), sized per chip generation:
    v5e/v6e have 128 MiB physical VMEM -> big single blocks; v7x has 64 MiB ->
    stay lean.  Falls back to the conservative (v7x-safe) setting."""
    cap = None
    try:
        cap = getattr(pltpu.get_tpu_info(), "vmem_capacity_bytes", None)
    except Exception:
        cap = None
    if cap is None:
        cap = 64 << 20
    if cap >= (96 << 20):          # v5e / v6e (128 MiB physical VMEM)
        return 64 << 20, 20 << 20
    return 44 << 20, 8 << 20       # v7x (64 MiB physical VMEM)


def gem_pool(x, p, eps=1e-6, *, static_p=None, row_tile=None, lane_tile=None):
    """GeM pooling: x (N, C, H, W), p (1,) learnable exponent -> (N, C, 1, 1).

    If `p` is concrete and integer-valued at trace time (or `static_p` is
    given), the per-element pow runs as repeated VPU multiplies instead of
    exp(p*log(x)) on the EUP.  `static_p`, if given, must be a positive
    integer and must equal the value of `p` (it is not checked at runtime).
    """
    N, C, H, W = x.shape
    NC, HW = N * C, H * W
    in_isz = x.dtype.itemsize
    out_isz = x.dtype.itemsize

    # --- exponent dispatch ----------------------------------------------------
    if static_p is not None:
        sp = float(static_p)
        if sp != round(sp) or sp < 1:
            raise ValueError(f"static_p must be a positive integer, got {static_p!r}")
        static_p = int(round(sp))
    else:
        # Trace-time concrete, integer-valued p -> identical math, no per-element
        # EUP transcendentals (keeps v6e/v7x HBM-bound instead of EUP-bound).
        try:
            pv = float(jnp.asarray(p).reshape(-1)[0])
        except Exception:
            pv = None
        if pv is not None and pv == round(pv) and 1 <= round(pv) <= 32:
            static_p = int(round(pv))

    # --- layout: row packing for small / misaligned spatial extents -----------
    g = _pick_group(NC, HW) if lane_tile is None else 1
    rows, L = NC // g, g * HW
    x2 = x.reshape(rows, L)                       # contiguous: free reshape

    # --- tiling (byte-budgeted, counts the (8,128)-padded small buffers) ------
    vmem_limit, x_target = _vmem_config()
    usable = vmem_limit - (4 << 20)               # headroom for internal scratch

    if lane_tile is None:
        single = 8 * _round_up(L, 128) * in_isz <= x_target
        lane_tile = L if single else max(128, (x_target // (8 * in_isz)) // 128 * 128)
    else:
        lane_tile = max(128, (int(lane_tile) // 128) * 128)
        single = lane_tile >= L
        if single:
            lane_tile = L
    if not single:
        # Balance lane blocks (often removes the ragged, masked last block).
        nlb = _cdiv(L, lane_tile)
        lane_tile = min(lane_tile, _round_up(_cdiv(L, nlb), 128))
    nlb = 1 if single else _cdiv(L, lane_tile)

    lane_pad = _round_up(lane_tile, 128)
    x_row_bytes = lane_pad * in_isz
    # Per-row VMEM: double-buffered x + double-buffered out (pads to 128 lanes,
    # i.e. ~512 B/row f32 even for a 1-wide output) + acc scratch in split mode.
    per_row = (2 * x_row_bytes + 2 * _round_up(g, 128) * out_isz
               + (0 if single else 128 * 4))

    if row_tile is not None:
        rt = max(1, int(row_tile))
        rt = rows if (rt >= rows or rows <= 8) else max(8, (rt // 8) * 8)
    elif rows <= 8:
        rt = rows                                  # full dim (tiny problem)
        # TODO(synk): if rows is tiny but HW is huge, split HW across the two
        # v7x cores with per-core partial accumulators combined in an epilogue.
    else:
        rt = min(usable // per_row, max(8, x_target // x_row_bytes))
        rt = max(8, (rt // 8) * 8)
        rt = min(rt, _round_up(rows, 8))
        # Megacore (v7x): prefer an even number (>= 2) of row blocks (best effort).
        nrb = _cdiv(rows, rt)
        if nrb == 1:
            rt = _round_up(_cdiv(rows, 2), 8)
        elif nrb % 2 == 1:
            rt = max(8, _round_up(_cdiv(rows, nrb + 1), 8))
    nrb = _cdiv(rows, rt)

    p_arr = jnp.asarray(p, jnp.float32).reshape(1)

    cost = pl.CostEstimate(
        flops=int(6 * NC * HW),
        transcendentals=int((0 if static_p is not None else 2 * NC * HW) + 2 * NC),
        bytes_accessed=int(NC * HW * in_isz + NC * out_isz + 4))

    def _x_spec(block_shape, index_map, n_buffers):
        if n_buffers > 2:
            try:
                # Deeper pipelining hides DMA-issue latency for tiny blocks;
                # silently skip if this Pallas has no pipeline_mode.
                return pl.BlockSpec(block_shape, index_map,
                                    pipeline_mode=pl.Buffered(n_buffers))
            except Exception:
                pass
        return pl.BlockSpec(block_shape, index_map)

    n_buf = 3 if (rt * x_row_bytes < (1 << 20) and nrb * nlb >= 4) else 2

    if single:
        out = pl.pallas_call(
            functools.partial(_gem_single_kernel, eps=float(eps), hw=HW, g=g,
                              static_p=static_p),
            out_shape=jax.ShapeDtypeStruct((rows, g), x.dtype),
            grid=(nrb,),
            in_specs=[pl.BlockSpec(memory_space=pltpu.SMEM),        # p scalar
                      _x_spec((rt, L), lambda i: (i, 0), n_buf)],   # x tile
            out_specs=pl.BlockSpec((rt, g), lambda i: (i, 0)),
            compiler_params=pltpu.CompilerParams(
                dimension_semantics=("parallel",),
                vmem_limit_bytes=vmem_limit),
            cost_estimate=cost,
        )(p_arr, x2)
    else:
        out = pl.pallas_call(
            functools.partial(_gem_accum_kernel, eps=float(eps), hw=HW,
                              lane_tile=lane_tile, static_p=static_p),
            out_shape=jax.ShapeDtypeStruct((rows, 1), x.dtype),
            grid=(nrb, nlb),
            in_specs=[pl.BlockSpec(memory_space=pltpu.SMEM),
                      _x_spec((rt, lane_tile), lambda i, k: (i, k), n_buf)],
            out_specs=pl.BlockSpec((rt, 1), lambda i, k: (i, 0)),
            scratch_shapes=[pltpu.VMEM((rt, 1), jnp.float32)],
            compiler_params=pltpu.CompilerParams(
                dimension_semantics=("parallel", "arbitrary"),
                vmem_limit_bytes=vmem_limit),
            cost_estimate=cost,
        )(p_arr, x2)

    return out.reshape(N, C, 1, 1)


def _gem_ref(x, p, eps):
    # Pure-JAX reference (clamp -> pow -> mean over H,W -> root).
    xp = jnp.power(jnp.maximum(x, eps), p[0])
    return jnp.power(jnp.mean(xp, axis=(2, 3), keepdims=True), 1.0 / p[0])


if __name__ == "__main__":
    key = jax.random.PRNGKey(0)
    x = jax.random.normal(key, (2, 4, 16, 16), dtype=jnp.float32)

    eps = 1e-6
    p_int = jnp.ones((1,), jnp.float32) * 3.0    # module default init: p = 3
    p_frac = jnp.ones((1,), jnp.float32) * 2.5   # learnable, non-integer p

    def check(out, x_in, p_in, name):
        ref = _gem_ref(x_in, p_in, eps)
        assert out.shape == ref.shape, (name, out.shape, ref.shape)
        err = float(jnp.max(jnp.abs(out - ref)))
        assert jnp.allclose(out, ref, atol=1e-5, rtol=1e-4), (name, err)

    # 1) Concrete integer p -> static VPU pow path, single lane block.
    out = gem_pool(x, p_int, eps=eps)
    jax.block_until_ready(out)
    check(out, x, p_int, "static_single")

    # 2) Non-integer p -> runtime exp(p*log(x)) path.
    out = gem_pool(x, p_frac, eps=eps)
    jax.block_until_ready(out)
    check(out, x, p_frac, "runtime_single")

    # 3) Small 7x7 feature map -> row packing + MXU segmented reduce.
    x3 = jax.random.normal(jax.random.PRNGKey(1), (3, 5, 7, 7), dtype=jnp.float32)
    out = gem_pool(x3, p_int, eps=eps)
    jax.block_until_ready(out)
    check(out, x3, p_int, "packed_static")
    out = gem_pool(x3, p_frac, eps=eps)
    jax.block_until_ready(out)
    check(out, x3, p_frac, "packed_runtime")

    # 4) Forced split-HW accumulator path with a ragged (masked) last lane block.
    x4 = jax.random.normal(jax.random.PRNGKey(2), (2, 4, 20, 20), dtype=jnp.float32)
    out = gem_pool(x4, p_frac, eps=eps, row_tile=8, lane_tile=256)
    jax.block_until_ready(out)
    check(out, x4, p_frac, "accum_runtime_masked")
    out = gem_pool(x4, p_int, eps=eps, row_tile=8, lane_tile=256)
    jax.block_until_ready(out)
    check(out, x4, p_int, "accum_static_masked")

    # 5) Auto path for the 20x20 map (packs rows, stays single-block).
    out = gem_pool(x4, p_int, eps=eps)
    jax.block_until_ready(out)
    check(out, x4, p_int, "packed_20x20")

    print("KERNEL_OK")
</pallas_src>

<mosaic_0001>
module attributes {stable_mosaic.version = 11 : i64} {
  func.func @_gem_single_kernel(%arg0: i32, %arg1: memref<1xf32, #tpu.memory_space<smem>>, %arg2: memref<8x256xf32, #tpu.memory_space<vmem>>, %arg3: memref<8x1xf32, #tpu.memory_space<vmem>>) attributes {dimension_semantics = [#tpu.dimension_semantics<parallel>], iteration_bounds = array<i64: 1>, scalar_prefetch = 0 : i64, scratch_operands = 0 : i64, tpu.core_type = #tpu.core_type<tc>, window_params = [{transform_indices = @transform_0, window_bounds = array<i64: 1>}, {transform_indices = @transform_1, window_bounds = array<i64: 8, 256>}, {transform_indices = @transform_2, window_bounds = array<i64: 8, 1>}]} {
    %c0 = arith.constant 0 : index
    %c0_0 = arith.constant 0 : index
    %0 = vector.load %arg2[%c0, %c0_0] : memref<8x256xf32, #tpu.memory_space<vmem>>, vector<8x256xf32>
    %cst = arith.constant 9.99999997E-7 : f32
    %1 = vector.broadcast %cst : f32 to vector<8x256xf32>
    %2 = arith.maximumf %0, %1 : vector<8x256xf32>
    %3 = arith.mulf %2, %2 : vector<8x256xf32>
    %4 = arith.mulf %2, %3 : vector<8x256xf32>
    %cst_1 = arith.constant dense<0.000000e+00> : vector<8xf32>
    %5 = vector.multi_reduction <add>, %4, %cst_1 [1] : vector<8x256xf32> to vector<8xf32>
    %6 = vector.shape_cast %5 : vector<8xf32> to vector<8x1xf32>
    %cst_2 = arith.constant 3.906250e-03 : f32
    %7 = vector.broadcast %cst_2 : f32 to vector<8x1xf32>
    %8 = arith.mulf %6, %7 : vector<8x1xf32>
    %9 = math.log %8 : vector<8x1xf32>
    %cst_3 = arith.constant 0.333333343 : f32
    %10 = vector.broadcast %cst_3 : f32 to vector<8x1xf32>
    %11 = arith.mulf %9, %10 : vector<8x1xf32>
    %12 = math.exp %11 : vector<8x1xf32>
    %c0_4 = arith.constant 0 : index
    %c0_5 = arith.constant 0 : index
    %13 = vector.load %arg3[%c0_4, %c0_5] : memref<8x1xf32, #tpu.memory_space<vmem>>, vector<8x1xf32>
    tpu.vector_store %arg3[%c0_4, %c0_5], %12 {strides = array<i32>} : memref<8x1xf32, #tpu.memory_space<vmem>>, vector<8x1xf32>,
    return
  }
  func.func @transform_0(%arg0: i32) -> i32 {
    %c0_i32 = arith.constant 0 : i32
    %c0_i32_0 = arith.constant 0 : i32
    return %c0_i32 : i32
  }
  func.func @transform_1(%arg0: i32) -> (i32, i32) {
    %c0_i32 = arith.constant 0 : i32
    %c0_i32_0 = arith.constant 0 : i32
    return %arg0, %c0_i32 : i32, i32
  }
  func.func @transform_2(%arg0: i32) -> (i32, i32) {
    %c0_i32 = arith.constant 0 : i32
    %c0_i32_0 = arith.constant 0 : i32
    return %arg0, %c0_i32 : i32, i32
  }
}

</mosaic_0001>

<llo_original>
// kernel: tpu_custom_call.1
$region0: #{tpu_custom_call.1}
  #allocation0 [shape = 'u32[]', space=smem, size = 0x4, offset = 0x4, fixed_abs, tag = 'smem constant byte address 0x4 - core index']
  #allocation1 [shape = 'u32[144,128]{1,0:T(1,128)}', space=vmem, size = 0x12000, scoped, tag = 'internal scratch']
  #allocation2 [shape = 'f32[1]{0:T(128)S(6)}', space=smem, size = 0x200, scoped, tag = 'scoped memory for tpu_custom_call.1']
  %s0 = inlined_call_operand.<no memory space> [shape: f32[1], index: 0, kind: input, shape index: {}]
  %s1 = inlined_call_operand.hbm [shape: f32[8,256], index: 1, kind: input, shape index: {}]
  %s2 = inlined_call_operand.vmem [shape: f32[8,1], index: 2, kind: output, shape index: {}]
  %s3 = sld [smem:[#allocation0]]
  $region22: #{tpu_custom_call.1} parent=0
    _
  %s5 = ssub.s32 1, %s3
  %s6 = scalar_select 0, %s5, %s3
  %7 = sst [smem:[#allocation2]] %s0
  $region1: #{tpu_custom_call.1} parent=0
    #allocation3 [shape = 'u8[8192]{0}', space=vmem, size = 0x2000, scoped, tag = 'input window, operand 1, single buffered']
    #allocation4 [shape = 's32[1]{0}', space=sflag, size = 0x4, scoped, tag = 'scoped memory for tpu_custom_call.1']
    %8 = vsyncpa [#allocation4], 0
    // Predicated region
    $region2: #{tpu_custom_call.1} parent=1 // pred_check
      _
    $region3: #{tpu_custom_call.1} parent=1 // pred_check_branch
      %10 = sbr.rel (0) target = $region5
    $region4: #{tpu_custom_call.1} parent=1 // pred_region
      _
    $region5: #{tpu_custom_call.1} parent=1 // pred_fallthru
      _
    // Predicated region
    $region6: #{tpu_custom_call.1} parent=1 // pred_check
      _
    $region7: #{tpu_custom_call.1} parent=1 // pred_check_branch
      %12 = sbr.rel (0) target = $region9
    $region8: #{tpu_custom_call.1} parent=1 // pred_region
      %s14 = ssub.s32 256, 256
      %15 = vsyncadd [#allocation4], %s14
      %s17 = sshll.u32 [#allocation3], 4
      %s18 = int_to_ptr.vmem [resolvable:$true] %s17
      %20 = dma.hbm_to_vmem [thread:$0]  %s1, 256, %s18, [#allocation4]
    $region9: #{tpu_custom_call.1} parent=1 // pred_fallthru
      _
    // Predicated region
    $region10: #{tpu_custom_call.1} parent=1 // pred_check
      _
    $region11: #{tpu_custom_call.1} parent=1 // pred_check_branch
      %22 = sbr.rel (0) target = $region13
    $region12: #{tpu_custom_call.1} parent=1 // pred_region
      %23 = dma.done [#allocation4], 256
    $region13: #{tpu_custom_call.1} parent=1 // pred_fallthru
      _
    %v24 = vld [vmem:[#allocation3] sm:$0xff]
    %v25 = vld [vmem:[#allocation3 + $0x8] sm:$0xff]
    %v26 = vmax.f32 %v24, 1e-06
    %v27 = vmax.f32 %v25, 1e-06
    %v28 = vmul.f32 %v26, %v26
    %v29 = vmul.f32 %v27, %v27
    %v30 = vmul.f32 %v26, %v28
    %v31 = vmul.f32 %v27, %v29
    %v32 = vadd.f32 %v30, %v31
    %33 = vadd.xlane.f32.xlu0 %v32
    %v34 = vpop.xlane.xlu0 %33
    %v35 = vmul.f32 %v34, 0.00390625
    %v36 = vlog2.pop %v35
    %v37 = vmul.f32 %v36, 0.6931472
    %v38 = vmul.f32 %v37, 0.33333334
    %v39 = vmul.f32 %v38, 1.442695
    %v40 = vpow.pop %v39
    %vm41 = vcmask 7168
    %42 = vst.msk [vmem:[%s2] sm:$0xff] %vm41, %v40
    // Predicated region
    $region14: #{tpu_custom_call.1} parent=1 // pred_check
      _
    $region15: #{tpu_custom_call.1} parent=1 // pred_check_branch
      %44 = sbr.rel (0) target = $region17
    $region16: #{tpu_custom_call.1} parent=1 // pred_region
      _
    $region17: #{tpu_custom_call.1} parent=1 // pred_fallthru
      _
    // Predicated region
    $region18: #{tpu_custom_call.1} parent=1 // pred_check
      _
    $region19: #{tpu_custom_call.1} parent=1 // pred_check_branch
      %46 = sbr.rel (0) target = $region21
    $region20: #{tpu_custom_call.1} parent=1 // pred_region
      _
    $region21: #{tpu_custom_call.1} parent=1 // pred_fallthru
      _
    %47 = vsyncpa [#allocation4], 1

</llo_original>
